<compile_context>
chip_gen: v5e
topology: v5e:2x2
jax: 0.10.0
libtpu: 0.0.40
codegen_flags: <defaults>
</compile_context>

<pallas_src>
import functools

import jax
import jax.numpy as jnp
from jax.experimental import pallas as pl
from jax.experimental.pallas import tpu as pltpu


def _row_norm_kernel(x_ref, norms_ref, acc_ref, *, d_total, td):
    # (TB, TD) tile of x; (TB, 1) resident f32 accumulator across the D axis.
    k = pl.program_id(1)

    @pl.when(k == 0)
    def _():
        acc_ref[...] = jnp.zeros_like(acc_ref)

    x = x_ref[...].astype(jnp.float32)
    if d_total % td != 0:
        # Last D block is partial: zero the out-of-range lanes so they do not
        # contaminate the sum of squares (batch padding is handled by slicing
        # in the wrapper instead).
        col = jax.lax.broadcasted_iota(jnp.int32, x.shape, 1)
        x = jnp.where(col < (d_total - k * td), x, 0.0)
    acc_ref[...] += jnp.sum(x * x, axis=1, keepdims=True)

    @pl.when(k == pl.num_programs(1) - 1)
    def _():
        norms_ref[...] = jnp.sqrt(acc_ref[...])


def _round_up(v, m):
    return ((v + m - 1) // m) * m


def _choose_tb(B, sub, max_rows):
    """Batch tile: as big as the byte budget allows, but guarantee >=2 tiles
    (and an even count when the count is small) so both v7x TensorCores get
    work.  Returns either B itself or a multiple of `sub`."""
    tb = min(B, max_rows)
    if tb < B:
        tb = max(sub, (tb // sub) * sub)
    num = -(-B // tb)
    if num == 1 and B > sub:
        tb = min(B, max(sub, _round_up(-(-B // 2), sub)))
        num = -(-B // tb)
    if 1 < num < 8 and num % 2 == 1:
        tb2 = max(sub, _round_up(-(-B // (num + 1)), sub))
        if tb2 < B and (-(-B // tb2)) % 2 == 0:
            tb = tb2
    return tb


def _row_norms(x, tile_rows=None, tile_cols=None):
    """Streams x in (TB, TD) tiles and returns the [B] vector of row L2 norms."""
    B, D = x.shape
    itemsize = jnp.dtype(x.dtype).itemsize
    sub = {1: 32, 2: 16}.get(itemsize, 8)          # sublane packing multiple

    # Generation-aware budgets: v5e/v6e (128 MiB VMEM) -> 16 MiB buffers,
    # 96 MiB scoped limit; v7x (64 MiB VMEM) -> 8 MiB buffers, 48 MiB limit.
    try:
        vmem_cap = int(pltpu.get_tpu_info().vmem_capacity_bytes)
    except Exception:                               # conservative fallback
        vmem_cap = 64 * 1024 * 1024
    buffer_budget = max(4 * 1024 * 1024, vmem_cap // 8)
    vmem_limit = int(min(vmem_cap * 3 // 4, 96 * 1024 * 1024))

    # Split the feature axis only if even a minimal (sub-row) tile of full rows
    # would blow the per-buffer byte budget (requires D % 128 == 0 for the
    # block shape; otherwise fall back to streaming full rows).
    if tile_cols is not None:
        td = int(tile_cols)
    elif sub * D * itemsize > buffer_budget and D % 128 == 0:
        td = min(D, max(128, (buffer_budget // (sub * itemsize)) // 128 * 128))
    else:
        td = D

    # Batch tile sized by bytes, not rows: one input buffer ~= buffer_budget.
    if tile_rows is not None:
        tb = int(tile_rows)
    else:
        max_rows = max(sub, (buffer_budget // max(1, td * itemsize)) // sub * sub)
        tb = _choose_tb(B, sub, max_rows)

    num_b_tiles = pl.cdiv(B, tb)
    num_d_tiles = pl.cdiv(D, td)
    padded_b = num_b_tiles * tb

    cost = pl.CostEstimate(
        flops=2 * B * D,
        transcendentals=B,
        bytes_accessed=B * D * itemsize + padded_b * 4,
    )

    kernel = functools.partial(_row_norm_kernel, d_total=D, td=td)
    norms = pl.pallas_call(
        kernel,
        out_shape=jax.ShapeDtypeStruct((padded_b, 1), jnp.float32),
        grid_spec=pltpu.PrefetchScalarGridSpec(
            num_scalar_prefetch=0,
            grid=(num_b_tiles, num_d_tiles),
            in_specs=[pl.BlockSpec((tb, td), lambda i, k: (i, k))],
            out_specs=pl.BlockSpec((tb, 1), lambda i, k: (i, 0)),
            scratch_shapes=[pltpu.VMEM((tb, 1), jnp.float32)],
        ),
        compiler_params=pltpu.CompilerParams(
            dimension_semantics=("parallel", "arbitrary"),
            vmem_limit_bytes=vmem_limit,
        ),
        cost_estimate=cost,
    )(x)
    return norms[:B, 0]                             # drop cdiv-padded rows


def ring_loss(x, radius, *, loss_type='auto', loss_weight=1.0,
              tile_rows=None, tile_cols=None):
    """Forward pass of RingLoss.

    x: [B, D] float array.  radius: [1] float array (the nn.Parameter; the
    module initialises it to -1, in which case the batch mean norm is used).
    """
    # TODO(synk): PyTorch mutates the radius Parameter in place on the first
    # forward (radius.data.fill_(norms.mean())); a functional caller must
    # persist that value itself between steps.
    norms = _row_norms(x, tile_rows=tile_rows, tile_cols=tile_cols)
    mean_norm = jnp.mean(norms)
    r0 = jnp.reshape(radius, (-1,))[0].astype(jnp.float32)
    r = jnp.where(r0 < 0.0, mean_norm, r0)

    if loss_type == 'auto':
        # PyTorch divides by x.mean().detach().clamp(min=0.5)
        denom = jnp.maximum(jax.lax.stop_gradient(mean_norm), 0.5)
        diff = (norms - r) / denom
        loss = jnp.mean(diff * diff) * loss_weight
    elif loss_type == 'l1':
        # smooth_l1 is symmetric in its args, so loss1 + loss2 == 2 * smooth_l1
        d = jnp.abs(norms - r)
        sl1 = jnp.mean(jnp.where(d < 1.0, 0.5 * d * d, d - 0.5))
        loss = 2.0 * sl1 * loss_weight
    else:  # 'l2'
        diff = norms - r
        loss = jnp.mean(diff * diff) * loss_weight
    return loss


def _ring_loss_ref(x, radius, loss_type='auto', loss_weight=1.0):
    # Plain-JAX reference mirroring the PyTorch forward.
    x = x.astype(jnp.float32)
    norms = jnp.sqrt(jnp.sum(x * x, axis=1))
    mean_norm = jnp.mean(norms)
    r0 = jnp.reshape(radius, (-1,))[0]
    r = jnp.where(r0 < 0.0, mean_norm, r0)
    if loss_type == 'auto':
        diff = (norms - r) / jnp.maximum(mean_norm, 0.5)
        return jnp.mean(diff * diff) * loss_weight
    elif loss_type == 'l1':
        d = jnp.abs(norms - r)
        return 2.0 * jnp.mean(jnp.where(d < 1.0, 0.5 * d * d, d - 0.5)) * loss_weight
    else:
        diff = norms - r
        return jnp.mean(diff * diff) * loss_weight


if __name__ == "__main__":
    k1, k2, k3, k4 = jax.random.split(jax.random.PRNGKey(0), 4)

    # Case 1: 'auto' with the module's parameter init (radius = -1), automatic
    # tiling (single-tile fallback / even-tile logic exercised).
    x1 = jax.random.normal(k1, (8, 32), dtype=jnp.float32)
    radius1 = jnp.full((1,), -1.0, dtype=jnp.float32)
    out1 = jax.block_until_ready(ring_loss(x1, radius1, loss_type='auto', loss_weight=1.0))
    ref1 = _ring_loss_ref(x1, radius1, loss_type='auto', loss_weight=1.0)
    assert jnp.allclose(out1, ref1, atol=1e-5, rtol=1e-5), (out1, ref1)

    # Case 2: 'l2' with positive radius and a ragged batch exercising the
    # multi-tile + padded-rows path (B=20, TB=8 -> 3 tiles, last partial).
    x2 = jax.random.normal(k2, (20, 32), dtype=jnp.float32)
    radius2 = jnp.full((1,), 2.5, dtype=jnp.float32)
    out2 = jax.block_until_ready(
        ring_loss(x2, radius2, loss_type='l2', loss_weight=0.01, tile_rows=8))
    ref2 = _ring_loss_ref(x2, radius2, loss_type='l2', loss_weight=0.01)
    assert jnp.allclose(out2, ref2, atol=1e-5, rtol=1e-5), (out2, ref2)

    # Case 3: 'l1' (smooth-L1 branch), multi-tile over the batch axis.
    x3 = jax.random.normal(k3, (16, 32), dtype=jnp.float32)
    radius3 = jnp.full((1,), -1.0, dtype=jnp.float32)
    out3 = jax.block_until_ready(
        ring_loss(x3, radius3, loss_type='l1', loss_weight=0.01, tile_rows=8))
    ref3 = _ring_loss_ref(x3, radius3, loss_type='l1', loss_weight=0.01)
    assert jnp.allclose(out3, ref3, atol=1e-5, rtol=1e-5), (out3, ref3)

    # Case 4: 'auto' exercising the split-D accumulator path with a partial
    # (masked) last D block (D=384, TD=256 -> 2 D-tiles).
    x4 = jax.random.normal(k4, (16, 384), dtype=jnp.float32)
    radius4 = jnp.full((1,), -1.0, dtype=jnp.float32)
    out4 = jax.block_until_ready(
        ring_loss(x4, radius4, loss_type='auto', loss_weight=1.0,
                  tile_rows=8, tile_cols=256))
    ref4 = _ring_loss_ref(x4, radius4, loss_type='auto', loss_weight=1.0)
    assert jnp.allclose(out4, ref4, atol=1e-5, rtol=1e-5), (out4, ref4)

    print("KERNEL_OK")
</pallas_src>

<mosaic_0001>
module attributes {stable_mosaic.version = 11 : i64} {
  func.func @_row_norm_kernel(%arg0: i32, %arg1: i32, %arg2: memref<8x32xf32, #tpu.memory_space<vmem>>, %arg3: memref<8x1xf32, #tpu.memory_space<vmem>>, %arg4: memref<8x1xf32, #tpu.memory_space<vmem>>) attributes {dimension_semantics = [#tpu.dimension_semantics<parallel>, #tpu.dimension_semantics<arbitrary>], iteration_bounds = array<i64: 1, 1>, scalar_prefetch = 0 : i64, scratch_operands = 1 : i64, tpu.core_type = #tpu.core_type<tc>, window_params = [{transform_indices = @transform_0, window_bounds = array<i64: 8, 32>}, {transform_indices = @transform_1, window_bounds = array<i64: 8, 1>}]} {
    %c0_i32 = arith.constant 0 : i32
    %0 = arith.cmpi eq, %arg1, %c0_i32 : i32
    %1 = arith.extui %0 : i1 to i32
    %c0_i32_0 = arith.constant 0 : i32
    %2 = arith.cmpi ne, %1, %c0_i32_0 : i32
    scf.if %2 {
      %cst_8 = arith.constant 0.000000e+00 : f32
      %13 = vector.broadcast %cst_8 : f32 to vector<8x1xf32>
      %c0_9 = arith.constant 0 : index
      %c0_10 = arith.constant 0 : index
      %14 = vector.load %arg4[%c0_9, %c0_10] : memref<8x1xf32, #tpu.memory_space<vmem>>, vector<8x1xf32>
      tpu.vector_store %arg4[%c0_9, %c0_10], %13 {strides = array<i32>} : memref<8x1xf32, #tpu.memory_space<vmem>>, vector<8x1xf32>,
    } else {
    }
    %c0 = arith.constant 0 : index
    %c0_1 = arith.constant 0 : index
    %3 = vector.load %arg2[%c0, %c0_1] : memref<8x32xf32, #tpu.memory_space<vmem>>, vector<8x32xf32>
    %c0_2 = arith.constant 0 : index
    %c0_3 = arith.constant 0 : index
    %4 = vector.load %arg4[%c0_2, %c0_3] : memref<8x1xf32, #tpu.memory_space<vmem>>, vector<8x1xf32>
    %5 = arith.mulf %3, %3 : vector<8x32xf32>
    %cst = arith.constant dense<0.000000e+00> : vector<8xf32>
    %6 = vector.multi_reduction <add>, %5, %cst [1] : vector<8x32xf32> to vector<8xf32>
    %7 = vector.shape_cast %6 : vector<8xf32> to vector<8x1xf32>
    %8 = arith.addf %4, %7 : vector<8x1xf32>
    %c0_4 = arith.constant 0 : index
    %c0_5 = arith.constant 0 : index
    %9 = vector.load %arg4[%c0_4, %c0_5] : memref<8x1xf32, #tpu.memory_space<vmem>>, vector<8x1xf32>
    tpu.vector_store %arg4[%c0_4, %c0_5], %8 {strides = array<i32>} : memref<8x1xf32, #tpu.memory_space<vmem>>, vector<8x1xf32>,
    %c0_i32_6 = arith.constant 0 : i32
    %10 = arith.cmpi eq, %arg1, %c0_i32_6 : i32
    %11 = arith.extui %10 : i1 to i32
    %c0_i32_7 = arith.constant 0 : i32
    %12 = arith.cmpi ne, %11, %c0_i32_7 : i32
    scf.if %12 {
      %c0_8 = arith.constant 0 : index
      %c0_9 = arith.constant 0 : index
      %13 = vector.load %arg4[%c0_8, %c0_9] : memref<8x1xf32, #tpu.memory_space<vmem>>, vector<8x1xf32>
      %14 = math.sqrt %13 : vector<8x1xf32>
      %c0_10 = arith.constant 0 : index
      %c0_11 = arith.constant 0 : index
      %15 = vector.load %arg3[%c0_10, %c0_11] : memref<8x1xf32, #tpu.memory_space<vmem>>, vector<8x1xf32>
      tpu.vector_store %arg3[%c0_10, %c0_11], %14 {strides = array<i32>} : memref<8x1xf32, #tpu.memory_space<vmem>>, vector<8x1xf32>,
    } else {
    }
    return
  }
  func.func @transform_0(%arg0: i32, %arg1: i32) -> (i32, i32) {
    %c0_i32 = arith.constant 0 : i32
    return %arg0, %arg1 : i32, i32
  }
  func.func @transform_1(%arg0: i32, %arg1: i32) -> (i32, i32) {
    %c0_i32 = arith.constant 0 : i32
    %c0_i32_0 = arith.constant 0 : i32
    return %arg0, %c0_i32 : i32, i32
  }
}

</mosaic_0001>

<llo_original>
// kernel: tpu_custom_call.1
$region0: #{tpu_custom_call.1}
  #allocation0 [shape = 'u32[]', space=smem, size = 0x4, offset = 0x4, fixed_abs, tag = 'smem constant byte address 0x4 - core index']
  #allocation1 [shape = 'u32[72,128]{1,0:T(1,128)}', space=vmem, size = 0x9000, scoped, tag = 'internal scratch']
  #allocation2 [shape = 'f32[8,1]{1,0:T(8,128)}', space=vmem, size = 0x1000, scoped, tag = 'scratch operand']
  %s0 = inlined_call_operand.hbm [shape: f32[8,32], index: 0, kind: input, shape index: {}]
  %s1 = inlined_call_operand.vmem [shape: f32[8,1], index: 1, kind: output, shape index: {}]
  %s2 = sld [smem:[#allocation0]]
  $region26: #{tpu_custom_call.1} parent=0
    _
  %s4 = ssub.s32 1, %s2
  %s5 = scalar_select 0, %s4, %s2
  $region1: #{tpu_custom_call.1} parent=0
    #allocation3 [shape = 'u8[4096]{0}', space=vmem, size = 0x1000, scoped, tag = 'input window, operand 0, single buffered']
    #allocation4 [shape = 's32[1]{0}', space=sflag, size = 0x4, scoped, tag = 'scoped memory for tpu_custom_call.1']
    %6 = vsyncpa [#allocation4], 0
    // Predicated region
    $region2: #{tpu_custom_call.1} parent=1 // pred_check
      _
    $region3: #{tpu_custom_call.1} parent=1 // pred_check_branch
      %8 = sbr.rel (0) target = $region5
    $region4: #{tpu_custom_call.1} parent=1 // pred_region
      %10 = vsyncadd [#allocation4], 0
      %s12 = sshll.u32 %s0, 4
      %s13 = int_to_ptr.hbm [resolvable:$true] %s12
      %s14 = sshll.u32 [#allocation3], 4
      %s15 = int_to_ptr.vmem [resolvable:$true] %s14
      %17 = dma.hbm_to_vmem [thread:$0]  %s13, 128, %s15, [#allocation4]
    $region5: #{tpu_custom_call.1} parent=1 // pred_fallthru
      _
    // Predicated region
    $region6: #{tpu_custom_call.1} parent=1 // pred_check
      _
    $region7: #{tpu_custom_call.1} parent=1 // pred_check_branch
      %19 = sbr.rel (0) target = $region9
    $region8: #{tpu_custom_call.1} parent=1 // pred_region
      %21 = dma.done [#allocation4], 128
    $region9: #{tpu_custom_call.1} parent=1 // pred_fallthru
      _
    %p22 = scmp.eq.s32.totalorder 0, 0
    // Predicated region
    $region10: #{tpu_custom_call.1} parent=1 // pred_check
      %p23 = pneg %p22
    $region11: #{tpu_custom_call.1} parent=1 // pred_check_branch
      %25 = sbr.rel (%p23) target = $region13
    $region12: #{tpu_custom_call.1} parent=1 // pred_region
      %vm26 = vcmask 7168
      %27 = vst.msk [vmem:[#allocation2] sm:$0xff] %vm26, 0.0
    $region13: #{tpu_custom_call.1} parent=1 // pred_fallthru
      _
    %v28 = vld [vmem:[#allocation3] sm:$0xff]
    %v29 = vld [vmem:[#allocation2] sm:$0xff]
    %v30 = vmul.f32 %v28, %v28
    %vm31 = vcmask 261120
    %v32 = vsel %vm31, %v30, 0.0
    %33 = vadd.xlane.f32.xlu0 %v32
    %v34 = vpop.xlane.xlu0 %33
    %v35 = vadd.f32 %v29, %v34
    %vm36 = vcmask 7168
    %37 = vst.msk [vmem:[#allocation2] sm:$0xff] %vm36, %v35
    // Predicated region
    $region14: #{tpu_custom_call.1} parent=1 // pred_check
      %p38 = pneg %p22
    $region15: #{tpu_custom_call.1} parent=1 // pred_check_branch
      %40 = sbr.rel (%p38) target = $region17
    $region16: #{tpu_custom_call.1} parent=1 // pred_region
      %v41 = vld [vmem:[#allocation2] sm:$0xff]
      %v42 = vrsqrt.pop %v41
      %v43 = vmul.f32 %v42, %v41
      %v44 = vmul.f32 %v43, %v42
      %v45 = vmul.f32 0.5, %v44
      %v46 = vsub.f32 1.5, %v45
      %v47 = vmul.f32 %v42, %v46
      %v48 = vmul.f32 %v41, %v47
      %vm49 = vcmp.eq.f32.partialorder %v41, inf
      %v50 = vsel %vm49, %v41, %v48
      %vm51 = vcmp.eq.f32.partialorder %v41, 0.0
      %v52 = vand.u32 %v41, 2147483648
      %v53 = vsel %vm51, %v52, %v50
      %54 = vst.msk [vmem:[%s1] sm:$0xff] %vm36, %v53
    $region17: #{tpu_custom_call.1} parent=1 // pred_fallthru
      _
    // Predicated region
    $region18: #{tpu_custom_call.1} parent=1 // pred_check
      _
    $region19: #{tpu_custom_call.1} parent=1 // pred_check_branch
      %56 = sbr.rel (0) target = $region21
    $region20: #{tpu_custom_call.1} parent=1 // pred_region
      _
    $region21: #{tpu_custom_call.1} parent=1 // pred_fallthru
      _
    // Predicated region
    $region22: #{tpu_custom_call.1} parent=1 // pred_check
      _
    $region23: #{tpu_custom_call.1} parent=1 // pred_check_branch
      %58 = sbr.rel (0) target = $region25
    $region24: #{tpu_custom_call.1} parent=1 // pred_region
      _
    $region25: #{tpu_custom_call.1} parent=1 // pred_fallthru
      _
    %59 = vsyncpa [#allocation4], 1

</llo_original>
